<compile_context>
chip_gen: v5e
topology: v5e:2x2
jax: 0.10.0
libtpu: 0.0.40
codegen_flags: <defaults>
</compile_context>

<pallas_src>
import math

import jax
import jax.numpy as jnp
from jax.experimental import pallas as pl
from jax.experimental.pallas import tpu as pltpu

HIDDEN = 32
_LANES = 128


def _round_up(n, m):
    return ((n + m - 1) // m) * m


def _mlp_kernel(x_ref, w1_ref, b1_ref, w2_ref, b2_ref, w3_ref, b3_ref, o_ref):
    """One fused batch tile of the 3-layer MLP (f32 MXU accumulation).

    Identical math for the packed (block-diagonal weights, lane-dense I/O)
    and the plain fallback layouts -- only the shapes differ.
    """
    h = jnp.dot(x_ref[...], w1_ref[...], preferred_element_type=jnp.float32)
    h = jnp.maximum(h + b1_ref[...], 0.0)
    h = jnp.dot(h, w2_ref[...], preferred_element_type=jnp.float32)
    h = jnp.maximum(h + b2_ref[...], 0.0)
    h = jnp.dot(h, w3_ref[...], preferred_element_type=jnp.float32)
    o_ref[...] = (h + b3_ref[...]).astype(o_ref.dtype)


def _pallas_mlp(x2d, w1, b1, w2, b2, w3, b3, *, block_rows):
    """Run the fused kernel over a 2-D `x2d` (rows, k). Weights (k, n), biases (1, n)."""
    rows, k = x2d.shape
    n_out = w3.shape[1]

    if rows <= block_rows:
        tb = rows                      # single step: full-dim block (no (8,128) constraint)
        grid = (1,)
    else:
        tb = max(8, (block_rows // 8) * 8)   # multi-step: keep sublane-divisible
        grid = (pl.cdiv(rows, tb),)          # ragged last block; rows are independent

    resident = lambda a: pl.BlockSpec(a.shape, lambda i: (0,) * a.ndim)

    return pl.pallas_call(
        _mlp_kernel,
        out_shape=jax.ShapeDtypeStruct((rows, n_out), jnp.float32),
        grid=grid,
        in_specs=[
            pl.BlockSpec((tb, k), lambda i: (i, 0)),   # x: streamed per batch tile
            resident(w1), resident(b1),                # params: VMEM-resident (constant maps)
            resident(w2), resident(b2),
            resident(w3), resident(b3),
        ],
        out_specs=pl.BlockSpec((tb, n_out), lambda i: (i, 0)),
        compiler_params=pltpu.CompilerParams(
            dimension_semantics=("parallel",),         # shards batch across 2 TCs on v7x
            vmem_limit_bytes=32 * 1024 * 1024,         # safe on v5e/v6e/v7x; packed tiles are small
        ),
    )(x2d, w1, b1, w2, b2, w3, b3)


def mlp_forward(x, params, *, block_batch=8192):
    """Fused MLP forward. x: (batch, input_size) float32.

    Weights are stored transposed vs PyTorch, i.e. (in, out), so each layer
    is y = x @ W + b (maps directly onto the MXU).
    """
    w1, b1 = params["w1"], params["b1"]
    w2, b2 = params["w2"], params["b2"]
    w3, b3 = params["w3"], params["b3"]
    batch, in_dim = x.shape
    out_dim = w3.shape[1]

    # Pack factor P: smallest row-group size making both the input view
    # (B/P, P*in) and the output view (B/P, P*out) lane-dense (last dim a
    # multiple of 128).  These views are free row-major bitcast reshapes.
    p_in = _LANES // math.gcd(in_dim, _LANES)
    p_out = _LANES // math.gcd(out_dim, _LANES)
    pack = (p_in * p_out) // math.gcd(p_in, p_out)

    if pack <= 32:
        # ---------- packed, lane-dense fast path ----------
        pad = _round_up(batch, pack)
        if pad != batch:
            # TODO(synk): handle the <pack-row tail separately to avoid this copy.
            x = jnp.pad(x, ((0, pad - batch), (0, 0)))
        xp = x.reshape(pad // pack, pack * in_dim)          # free bitcast view of HBM

        eye = jnp.eye(pack, dtype=jnp.float32)
        w1p = jnp.kron(eye, w1); b1p = jnp.tile(b1, (1, pack))   # block-diag weights,
        w2p = jnp.kron(eye, w2); b2p = jnp.tile(b2, (1, pack))   # tiled biases (tiny,
        w3p = jnp.kron(eye, w3); b3p = jnp.tile(b3, (1, pack))   # VMEM-resident)

        block_rows = max(1, block_batch // pack)
        outp = _pallas_mlp(xp, w1p, b1p, w2p, b2p, w3p, b3p, block_rows=block_rows)
        out = outp.reshape(pad, out_dim)                    # free bitcast view back
        return out[:batch]

    # ---------- fallback: lane-sparse but correct for awkward feature sizes ----------
    out = _pallas_mlp(x, w1, b1, w2, b2, w3, b3, block_rows=min(block_batch, 2048))
    return out[:batch]


def init_params(key, input_size, output_size):
    """Deterministic init matching torch.nn.Linear defaults
    (uniform(-1/sqrt(fan_in), 1/sqrt(fan_in)) for weight and bias)."""
    def linear_init(k, fan_in, fan_out):
        kw, kb = jax.random.split(k)
        bound = 1.0 / jnp.sqrt(fan_in)
        w = jax.random.uniform(kw, (fan_in, fan_out), jnp.float32, -bound, bound)
        b = jax.random.uniform(kb, (1, fan_out), jnp.float32, -bound, bound)
        return w, b

    k1, k2, k3 = jax.random.split(key, 3)
    w1, b1 = linear_init(k1, input_size, HIDDEN)
    w2, b2 = linear_init(k2, HIDDEN, HIDDEN)
    w3, b3 = linear_init(k3, HIDDEN, output_size)
    return {"w1": w1, "b1": b1, "w2": w2, "b2": b2, "w3": w3, "b3": b3}


def _reference(x, p):
    h = jnp.maximum(x @ p["w1"] + p["b1"], 0.0)
    h = jnp.maximum(h @ p["w2"] + p["b2"], 0.0)
    return h @ p["w3"] + p["b3"]


if __name__ == "__main__":
    key = jax.random.PRNGKey(0)
    k_params, k1, k2, k3 = jax.random.split(key, 4)

    input_size, output_size = 16, 8
    params = init_params(k_params, input_size, output_size)

    # Small batch: packed path, single grid step, no padding (32 % 16 == 0).
    x = jax.random.normal(k1, (32, input_size), jnp.float32)
    out = mlp_forward(x, params)
    jax.block_until_ready(out)
    ref = _reference(x, params)
    assert out.shape == (32, output_size)
    assert jnp.allclose(out, ref, atol=1e-5, rtol=1e-5), "packed single-tile mismatch"

    # Multi-tile packed path + non-multiple-of-pack batch (ragged last block).
    x2 = jax.random.normal(k2, (1000, input_size), jnp.float32)
    out2 = mlp_forward(x2, params, block_batch=256)
    jax.block_until_ready(out2)
    ref2 = _reference(x2, params)
    assert out2.shape == (1000, output_size)
    assert jnp.allclose(out2, ref2, atol=1e-5, rtol=1e-5), "packed multi-tile mismatch"

    # Awkward feature sizes -> lane-sparse fallback path.
    params3 = init_params(k3, 10, 6)
    x3 = jax.random.normal(k3, (37, 10), jnp.float32)
    out3 = mlp_forward(x3, params3)
    jax.block_until_ready(out3)
    ref3 = _reference(x3, params3)
    assert out3.shape == (37, 6)
    assert jnp.allclose(out3, ref3, atol=1e-5, rtol=1e-5), "fallback mismatch"

    print("KERNEL_OK")
</pallas_src>

<mosaic_0001>
module attributes {stable_mosaic.version = 11 : i64} {
  func.func @_mlp_kernel(%arg0: i32, %arg1: memref<2x256xf32, #tpu.memory_space<vmem>>, %arg2: memref<256x512xf32, #tpu.memory_space<vmem>>, %arg3: memref<1x512xf32, #tpu.memory_space<vmem>>, %arg4: memref<512x512xf32, #tpu.memory_space<vmem>>, %arg5: memref<1x512xf32, #tpu.memory_space<vmem>>, %arg6: memref<512x128xf32, #tpu.memory_space<vmem>>, %arg7: memref<1x128xf32, #tpu.memory_space<vmem>>, %arg8: memref<2x128xf32, #tpu.memory_space<vmem>>) attributes {dimension_semantics = [#tpu.dimension_semantics<parallel>], iteration_bounds = array<i64: 1>, scalar_prefetch = 0 : i64, scratch_operands = 0 : i64, tpu.core_type = #tpu.core_type<tc>, window_params = [{transform_indices = @transform_0, window_bounds = array<i64: 2, 256>}, {pipeline_mode = #tpu.pipeline_mode<synchronous>, transform_indices = @transform_1, window_bounds = array<i64: 256, 512>}, {pipeline_mode = #tpu.pipeline_mode<synchronous>, transform_indices = @transform_2, window_bounds = array<i64: 1, 512>}, {pipeline_mode = #tpu.pipeline_mode<synchronous>, transform_indices = @transform_3, window_bounds = array<i64: 512, 512>}, {pipeline_mode = #tpu.pipeline_mode<synchronous>, transform_indices = @transform_4, window_bounds = array<i64: 1, 512>}, {pipeline_mode = #tpu.pipeline_mode<synchronous>, transform_indices = @transform_5, window_bounds = array<i64: 512, 128>}, {pipeline_mode = #tpu.pipeline_mode<synchronous>, transform_indices = @transform_6, window_bounds = array<i64: 1, 128>}, {transform_indices = @transform_7, window_bounds = array<i64: 2, 128>}]} {
    %c0 = arith.constant 0 : index
    %c0_0 = arith.constant 0 : index
    %0 = vector.load %arg1[%c0, %c0_0] : memref<2x256xf32, #tpu.memory_space<vmem>>, vector<2x256xf32>
    %c0_1 = arith.constant 0 : index
    %c0_2 = arith.constant 0 : index
    %1 = vector.load %arg2[%c0_1, %c0_2] : memref<256x512xf32, #tpu.memory_space<vmem>>, vector<256x512xf32>
    %cst = arith.constant dense<0.000000e+00> : vector<2x512xf32>
    %2 = tpu.matmul %0, %1, %cst {dimension_numbers = #tpu.dot_dimension_numbers<[1], [0], [0], [1], [0, 0, 1, 1], [], []>} : vector<2x256xf32>, vector<256x512xf32>, vector<2x512xf32> -> vector<2x512xf32>
    %c0_3 = arith.constant 0 : index
    %c0_4 = arith.constant 0 : index
    %3 = vector.load %arg3[%c0_3, %c0_4] : memref<1x512xf32, #tpu.memory_space<vmem>>, vector<1x512xf32>
    %4 = vector.broadcast %3 : vector<1x512xf32> to vector<2x512xf32>
    %5 = arith.addf %2, %4 : vector<2x512xf32>
    %cst_5 = arith.constant 0.000000e+00 : f32
    %6 = vector.broadcast %cst_5 : f32 to vector<2x512xf32>
    %7 = arith.maximumf %5, %6 : vector<2x512xf32>
    %c0_6 = arith.constant 0 : index
    %c0_7 = arith.constant 0 : index
    %8 = vector.load %arg4[%c0_6, %c0_7] : memref<512x512xf32, #tpu.memory_space<vmem>>, vector<512x512xf32>
    %cst_8 = arith.constant dense<0.000000e+00> : vector<2x512xf32>
    %9 = tpu.matmul %7, %8, %cst_8 {dimension_numbers = #tpu.dot_dimension_numbers<[1], [0], [0], [1], [0, 0, 1, 1], [], []>} : vector<2x512xf32>, vector<512x512xf32>, vector<2x512xf32> -> vector<2x512xf32>
    %c0_9 = arith.constant 0 : index
    %c0_10 = arith.constant 0 : index
    %10 = vector.load %arg5[%c0_9, %c0_10] : memref<1x512xf32, #tpu.memory_space<vmem>>, vector<1x512xf32>
    %11 = vector.broadcast %10 : vector<1x512xf32> to vector<2x512xf32>
    %12 = arith.addf %9, %11 : vector<2x512xf32>
    %cst_11 = arith.constant 0.000000e+00 : f32
    %13 = vector.broadcast %cst_11 : f32 to vector<2x512xf32>
    %14 = arith.maximumf %12, %13 : vector<2x512xf32>
    %c0_12 = arith.constant 0 : index
    %c0_13 = arith.constant 0 : index
    %15 = vector.load %arg6[%c0_12, %c0_13] : memref<512x128xf32, #tpu.memory_space<vmem>>, vector<512x128xf32>
    %cst_14 = arith.constant dense<0.000000e+00> : vector<2x128xf32>
    %16 = tpu.matmul %14, %15, %cst_14 {dimension_numbers = #tpu.dot_dimension_numbers<[1], [0], [0], [1], [0, 0, 1, 1], [], []>} : vector<2x512xf32>, vector<512x128xf32>, vector<2x128xf32> -> vector<2x128xf32>
    %c0_15 = arith.constant 0 : index
    %c0_16 = arith.constant 0 : index
    %17 = vector.load %arg7[%c0_15, %c0_16] : memref<1x128xf32, #tpu.memory_space<vmem>>, vector<1x128xf32>
    %18 = vector.broadcast %17 : vector<1x128xf32> to vector<2x128xf32>
    %19 = arith.addf %16, %18 : vector<2x128xf32>
    %c0_17 = arith.constant 0 : index
    %c0_18 = arith.constant 0 : index
    %20 = vector.load %arg8[%c0_17, %c0_18] : memref<2x128xf32, #tpu.memory_space<vmem>>, vector<2x128xf32>
    tpu.vector_store %arg8[%c0_17, %c0_18], %19 {strides = array<i32>} : memref<2x128xf32, #tpu.memory_space<vmem>>, vector<2x128xf32>,
    return
  }
  func.func @transform_0(%arg0: i32) -> (i32, i32) {
    %c0_i32 = arith.constant 0 : i32
    %c0_i32_0 = arith.constant 0 : i32
    return %arg0, %c0_i32 : i32, i32
  }
  func.func @transform_1(%arg0: i32) -> (i32, i32) {
    %c0_i32 = arith.constant 0 : i32
    %c0_i32_0 = arith.constant 0 : i32
    %c0_i32_1 = arith.constant 0 : i32
    return %c0_i32, %c0_i32_0 : i32, i32
  }
  func.func @transform_2(%arg0: i32) -> (i32, i32) {
    %c0_i32 = arith.constant 0 : i32
    %c0_i32_0 = arith.constant 0 : i32
    %c0_i32_1 = arith.constant 0 : i32
    return %c0_i32, %c0_i32_0 : i32, i32
  }
  func.func @transform_3(%arg0: i32) -> (i32, i32) {
    %c0_i32 = arith.constant 0 : i32
    %c0_i32_0 = arith.constant 0 : i32
    %c0_i32_1 = arith.constant 0 : i32
    return %c0_i32, %c0_i32_0 : i32, i32
  }
  func.func @transform_4(%arg0: i32) -> (i32, i32) {
    %c0_i32 = arith.constant 0 : i32
    %c0_i32_0 = arith.constant 0 : i32
    %c0_i32_1 = arith.constant 0 : i32
    return %c0_i32, %c0_i32_0 : i32, i32
  }
  func.func @transform_5(%arg0: i32) -> (i32, i32) {
    %c0_i32 = arith.constant 0 : i32
    %c0_i32_0 = arith.constant 0 : i32
    %c0_i32_1 = arith.constant 0 : i32
    return %c0_i32, %c0_i32_0 : i32, i32
  }
  func.func @transform_6(%arg0: i32) -> (i32, i32) {
    %c0_i32 = arith.constant 0 : i32
    %c0_i32_0 = arith.constant 0 : i32
    %c0_i32_1 = arith.constant 0 : i32
    return %c0_i32, %c0_i32_0 : i32, i32
  }
  func.func @transform_7(%arg0: i32) -> (i32, i32) {
    %c0_i32 = arith.constant 0 : i32
    %c0_i32_0 = arith.constant 0 : i32
    return %arg0, %c0_i32 : i32, i32
  }
}

</mosaic_0001>

<llo_original>
// kernel: tpu_custom_call.1
$region0: #{tpu_custom_call.1}
  #allocation0 [shape = 'u32[]', space=smem, size = 0x4, offset = 0x4, fixed_abs, tag = 'smem constant byte address 0x4 - core index']
  #allocation1 [shape = 'u32[72,128]{1,0:T(1,128)}', space=vmem, size = 0x9000, scoped, tag = 'internal scratch']
  %s0 = inlined_call_operand.hbm [shape: f32[2,256], index: 0, kind: input, shape index: {}]
  %s1 = inlined_call_operand.hbm [shape: f32[256,512], index: 1, kind: input, shape index: {}]
  %s2 = inlined_call_operand.hbm [shape: f32[1,512], index: 2, kind: input, shape index: {}]
  %s3 = inlined_call_operand.hbm [shape: f32[512,512], index: 3, kind: input, shape index: {}]
  %s4 = inlined_call_operand.hbm [shape: f32[1,512], index: 4, kind: input, shape index: {}]
  %s5 = inlined_call_operand.hbm [shape: f32[512,128], index: 5, kind: input, shape index: {}]
  %s6 = inlined_call_operand.vmem [shape: f32[1,128], index: 6, kind: input, shape index: {}]
  %s7 = inlined_call_operand.hbm [shape: f32[2,128], index: 7, kind: output, shape index: {}]
  %s8 = sld [smem:[#allocation0]]
  $region62: #{tpu_custom_call.1} parent=0
    _
  %s10 = ssub.s32 1, %s8
  %s11 = scalar_select 0, %s10, %s8
  $region1: #{tpu_custom_call.1} parent=0
    #allocation2 [shape = 'u8[2048]{0}', space=vmem, size = 0x800, scoped, tag = 'input window, operand 0, single buffered']
    #allocation3 [shape = 's32[1]{0}', space=sflag, size = 0x4, scoped, tag = 'scoped memory for tpu_custom_call.1']
    #allocation4 [shape = 's32[1]{0}', space=sflag, size = 0x4, scoped, tag = 'scoped memory for tpu_custom_call.1']
    #allocation5 [shape = 'u8[524288]{0}', space=vmem, size = 0x80000, scoped, tag = 'input window, operand 1, single buffered']
    #allocation6 [shape = 's32[1]{0}', space=sflag, size = 0x4, scoped, tag = 'scoped memory for tpu_custom_call.1']
    #allocation7 [shape = 'u8[2048]{0}', space=vmem, size = 0x800, scoped, tag = 'input window, operand 2, single buffered']
    #allocation8 [shape = 'u8[1048576]{0}', space=vmem, size = 0x100000, scoped, tag = 'input window, operand 3, single buffered']
    #allocation9 [shape = 's32[1]{0}', space=sflag, size = 0x4, scoped, tag = 'scoped memory for tpu_custom_call.1']
    #allocation10 [shape = 'u8[2048]{0}', space=vmem, size = 0x800, scoped, tag = 'input window, operand 4, single buffered']
    #allocation11 [shape = 'u8[262144]{0}', space=vmem, size = 0x40000, scoped, tag = 'input window, operand 5, single buffered']
    #allocation12 [shape = 's32[1]{0}', space=sflag, size = 0x4, scoped, tag = 'scoped memory for tpu_custom_call.1']
    #allocation13 [shape = 'u8[1024]{0}', space=vmem, size = 0x400, scoped, tag = 'output window, operand 0, single buffered']
    %12 = vsyncpa [#allocation3], 0
    %13 = vsyncpa [#allocation6], 0
    %14 = vsyncpa [#allocation9], 0
    %15 = vsyncpa [#allocation12], 0
    %16 = vsyncpa [#allocation4], 0
    // Predicated region
    $region2: #{tpu_custom_call.1} parent=1 // pred_check
      _
    $region3: #{tpu_custom_call.1} parent=1 // pred_check_branch
      %18 = sbr.rel (0) target = $region5
    $region4: #{tpu_custom_call.1} parent=1 // pred_region
      %20 = vsyncadd [#allocation3], 0
      %s22 = sshll.u32 %s0, 4
      %s23 = int_to_ptr.hbm [resolvable:$true] %s22
      %s24 = sshll.u32 [#allocation2], 4
      %s25 = int_to_ptr.vmem [resolvable:$true] %s24
      %27 = dma.hbm_to_vmem [thread:$0]  %s23, 64, %s25, [#allocation3]
    $region5: #{tpu_custom_call.1} parent=1 // pred_fallthru
      _
    // Predicated region
    $region6: #{tpu_custom_call.1} parent=1 // pred_check
      _
    $region7: #{tpu_custom_call.1} parent=1 // pred_check_branch
      %29 = sbr.rel (0) target = $region9
    $region8: #{tpu_custom_call.1} parent=1 // pred_region
      %31 = vsyncadd [#allocation6], 0
      %s32 = sshll.u32 %s1, 4
      %s33 = int_to_ptr.hbm [resolvable:$true] %s32
      %s34 = sshll.u32 [#allocation5], 4
      %s35 = int_to_ptr.vmem [resolvable:$true] %s34
      %40 = dma.hbm_to_vmem [thread:$0]  %s33, 16384, %s35, [#allocation6], 512, 512, 32
    $region9: #{tpu_custom_call.1} parent=1 // pred_fallthru
      _
    // Predicated region
    $region10: #{tpu_custom_call.1} parent=1 // pred_check
      _
    $region11: #{tpu_custom_call.1} parent=1 // pred_check_branch
      %42 = sbr.rel (0) target = $region13
    $region12: #{tpu_custom_call.1} parent=1 // pred_region
      %44 = vsyncadd [#allocation6], 0
      %s46 = sshll.u32 %s2, 4
      %s47 = int_to_ptr.hbm [resolvable:$true] %s46
      %s48 = sshll.u32 [#allocation7], 4
      %s49 = int_to_ptr.vmem [resolvable:$true] %s48
      %51 = dma.hbm_to_vmem [thread:$0]  %s47, 64, %s49, [#allocation6]
    $region13: #{tpu_custom_call.1} parent=1 // pred_fallthru
      _
    // Predicated region
    $region14: #{tpu_custom_call.1} parent=1 // pred_check
      _
    $region15: #{tpu_custom_call.1} parent=1 // pred_check_branch
      %53 = sbr.rel (0) target = $region17
    $region16: #{tpu_custom_call.1} parent=1 // pred_region
      %55 = vsyncadd [#allocation9], 0
      %s56 = sshll.u32 %s3, 4
      %s57 = int_to_ptr.hbm [resolvable:$true] %s56
      %s58 = sshll.u32 [#allocation8], 4
      %s59 = int_to_ptr.vmem [resolvable:$true] %s58
      %64 = dma.hbm_to_vmem [thread:$0]  %s57, 32768, %s59, [#allocation9], 512, 512, 32
    $region17: #{tpu_custom_call.1} parent=1 // pred_fallthru
      _
    // Predicated region
    $region18: #{tpu_custom_call.1} parent=1 // pred_check
      _
    $region19: #{tpu_custom_call.1} parent=1 // pred_check_branch
      %66 = sbr.rel (0) target = $region21
    $region20: #{tpu_custom_call.1} parent=1 // pred_region
      %68 = vsyncadd [#allocation9], 0
      %s70 = sshll.u32 %s4, 4
      %s71 = int_to_ptr.hbm [resolvable:$true] %s70
      %s72 = sshll.u32 [#allocation10], 4
      %s73 = int_to_ptr.vmem [resolvable:$true] %s72
      %75 = dma.hbm_to_vmem [thread:$0]  %s71, 64, %s73, [#allocation9]
    $region21: #{tpu_custom_call.1} parent=1 // pred_fallthru
      _
    // Predicated region
    $region22: #{tpu_custom_call.1} parent=1 // pred_check
      _
    $region23: #{tpu_custom_call.1} parent=1 // pred_check_branch
      %77 = sbr.rel (0) target = $region25
    $region24: #{tpu_custom_call.1} parent=1 // pred_region
      %79 = vsyncadd [#allocation12], 0
      %s80 = sshll.u32 %s5, 4
      %s81 = int_to_ptr.hbm [resolvable:$true] %s80
      %s82 = sshll.u32 [#allocation11], 4
      %s83 = int_to_ptr.vmem [resolvable:$true] %s82
      %88 = dma.hbm_to_vmem [thread:$0]  %s81, 8192, %s83, [#allocation12], 128, 128, 8
    $region25: #{tpu_custom_call.1} parent=1 // pred_fallthru
      _
    // Predicated region
    $region26: #{tpu_custom_call.1} parent=1 // pred_check
      _
    $region27: #{tpu_custom_call.1} parent=1 // pred_check_branch
      %90 = sbr.rel (0) target = $region29
    $region28: #{tpu_custom_call.1} parent=1 // pred_region
      _
    $region29: #{tpu_custom_call.1} parent=1 // pred_fallthru
      _
    // Predicated region
    $region30: #{tpu_custom_call.1} parent=1 // pred_check
      _
    $region31: #{tpu_custom_call.1} parent=1 // pred_check_branch
      %92 = sbr.rel (0) target = $region33
    $region32: #{tpu_custom_call.1} parent=1 // pred_region
      %94 = dma.done [#allocation3], 64
    $region33: #{tpu_custom_call.1} parent=1 // pred_fallthru
      _
    // Predicated region
    $region34: #{tpu_custom_call.1} parent=1 // pred_check
      _
    $region35: #{tpu_custom_call.1} parent=1 // pred_check_branch
      %96 = sbr.rel (0) target = $region37
    $region36: #{tpu_custom_call.1} parent=1 // pred_region
      %98 = dma.done [#allocation6], 16384
    $region37: #{tpu_custom_call.1} parent=1 // pred_fallthru
      _
    // Predicated region
    $region38: #{tpu_custom_call.1} parent=1 // pred_check
      _
    $region39: #{tpu_custom_call.1} parent=1 // pred_check_branch
      %100 = sbr.rel (0) target = $region41
    $region40: #{tpu_custom_call.1} parent=1 // pred_region
      %102 = dma.done [#allocation6], 64
    $region41: #{tpu_custom_call.1} parent=1 // pred_fallthru
      _
    // Predicated region
    $region42: #{tpu_custom_call.1} parent=1 // pred_check
      _
    $region43: #{tpu_custom_call.1} parent=1 // pred_check_branch
      %104 = sbr.rel (0) target = $region45
    $region44: #{tpu_custom_call.1} parent=1 // pred_region
      %106 = dma.done [#allocation9], 32768
    $region45: #{tpu_custom_call.1} parent=1 // pred_fallthru
      _
    // Predicated region
    $region46: #{tpu_custom_call.1} parent=1 // pred_check
      _
    $region47: #{tpu_custom_call.1} parent=1 // pred_check_branch
      %108 = sbr.rel (0) target = $region49
    $region48: #{tpu_custom_call.1} parent=1 // pred_region
      %110 = dma.done [#allocation9], 64
    $region49: #{tpu_custom_call.1} parent=1 // pred_fallthru
      _
    // Predicated region
    $region50: #{tpu_custom_call.1} parent=1 // pred_check
      _
    $region51: #{tpu_custom_call.1} parent=1 // pred_check_branch
      %112 = sbr.rel (0) target = $region53
    $region52: #{tpu_custom_call.1} parent=1 // pred_region
      %114 = dma.done [#allocation12], 8192
    $region53: #{tpu_custom_call.1} parent=1 // pred_fallthru
      _
    %v115 = vld [vmem:[#allocation2] sm:$0xf]
    %v116 = vld [vmem:[#allocation5] sm:$0xff]
    %v117 = vld [vmem:[#allocation5 + $0x8] sm:$0xff]
    %v118 = vld [vmem:[#allocation5 + $0x10] sm:$0xff]
    %v119 = vld [vmem:[#allocation5 + $0x18] sm:$0xff]
    %v120 = vld [vmem:[#allocation5 + $0x20] sm:$0xff]
    %v121 = vld [vmem:[#allocation5 + $0x28] sm:$0xff]
    %v122 = vld [vmem:[#allocation5 + $0x30] sm:$0xff]
    %v123 = vld [vmem:[#allocation5 + $0x38] sm:$0xff]
    %v124 = vld [vmem:[#allocation5 + $0x40] sm:$0xff]
    %v125 = vld [vmem:[#allocation5 + $0x48] sm:$0xff]
    %v126 = vld [vmem:[#allocation5 + $0x50] sm:$0xff]
    %v127 = vld [vmem:[#allocation5 + $0x58] sm:$0xff]
    %v128 = vld [vmem:[#allocation5 + $0x60] sm:$0xff]
    %v129 = vld [vmem:[#allocation5 + $0x68] sm:$0xff]
    %v130 = vld [vmem:[#allocation5 + $0x70] sm:$0xff]
    %v131 = vld [vmem:[#allocation5 + $0x78] sm:$0xff]
    %v132 = vld [vmem:[#allocation5 + $0x80] sm:$0xff]
    %v133 = vld [vmem:[#allocation5 + $0x88] sm:$0xff]
    %v134 = vld [vmem:[#allocation5 + $0x90] sm:$0xff]
    %v135 = vld [vmem:[#allocation5 + $0x98] sm:$0xff]
    %v136 = vld [vmem:[#allocation5 + $0xa0] sm:$0xff]
    %v137 = vld [vmem:[#allocation5 + $0xa8] sm:$0xff]
    %v138 = vld [vmem:[#allocation5 + $0xb0] sm:$0xff]
    %v139 = vld [vmem:[#allocation5 + $0xb8] sm:$0xff]
    %v140 = vld [vmem:[#allocation5 + $0xc0] sm:$0xff]
    %v141 = vld [vmem:[#allocation5 + $0xc8] sm:$0xff]
    %v142 = vld [vmem:[#allocation5 + $0xd0] sm:$0xff]
    %v143 = vld [vmem:[#allocation5 + $0xd8] sm:$0xff]
    %v144 = vld [vmem:[#allocation5 + $0xe0] sm:$0xff]
    %v145 = vld [vmem:[#allocation5 + $0xe8] sm:$0xff]
    %v146 = vld [vmem:[#allocation5 + $0xf0] sm:$0xff]
    %v147 = vld [vmem:[#allocation5 + $0xf8] sm:$0xff]
    %v148 = vld [vmem:[#allocation5 + $0x100] sm:$0xff]
    %v149 = vld [vmem:[#allocation5 + $0x108] sm:$0xff]
    %v150 = vld [vmem:[#allocation5 + $0x110] sm:$0xff]
    %v151 = vld [vmem:[#allocation5 + $0x118] sm:$0xff]
    %v152 = vld [vmem:[#allocation5 + $0x120] sm:$0xff]
    %v153 = vld [vmem:[#allocation5 + $0x128] sm:$0xff]
    %v154 = vld [vmem:[#allocation5 + $0x130] sm:$0xff]
    %v155 = vld [vmem:[#allocation5 + $0x138] sm:$0xff]
    %v156 = vld [vmem:[#allocation5 + $0x140] sm:$0xff]
    %v157 = vld [vmem:[#allocation5 + $0x148] sm:$0xff]
    %v158 = vld [vmem:[#allocation5 + $0x150] sm:$0xff]
    %v159 = vld [vmem:[#allocation5 + $0x158] sm:$0xff]
    %v160 = vld [vmem:[#allocation5 + $0x160] sm:$0xff]
    %v161 = vld [vmem:[#allocation5 + $0x168] sm:$0xff]
    %v162 = vld [vmem:[#allocation5 + $0x170] sm:$0xff]
    %v163 = vld [vmem:[#allocation5 + $0x178] sm:$0xff]
    %v164 = vld [vmem:[#allocation5 + $0x180] sm:$0xff]
    %v165 = vld [vmem:[#allocation5 + $0x188] sm:$0xff]
    %v166 = vld [vmem:[#allocation5 + $0x190] sm:$0xff]
    %v167 = vld [vmem:[#allocation5 + $0x198] sm:$0xff]
    %v168 = vld [vmem:[#allocation5 + $0x1a0] sm:$0xff]
    %v169 = vld [vmem:[#allocation5 + $0x1a8] sm:$0xff]
    %v170 = vld [vmem:[#allocation5 + $0x1b0] sm:$0xff]
    %v171 = vld [vmem:[#allocation5 + $0x1b8] sm:$0xff]
    %v172 = vld [vmem:[#allocation5 + $0x1c0] sm:$0xff]
    %v173 = vld [vmem:[#allocation5 + $0x1c8] sm:$0xff]
    %v174 = vld [vmem:[#allocation5 + $0x1d0] sm:$0xff]
    %v175 = vld [vmem:[#allocation5 + $0x1d8] sm:$0xff]
    %v176 = vld [vmem:[#allocation5 + $0x1e0] sm:$0xff]
    %v177 = vld [vmem:[#allocation5 + $0x1e8] sm:$0xff]
    %v178 = vld [vmem:[#allocation5 + $0x1f0] sm:$0xff]
    %v179 = vld [vmem:[#allocation5 + $0x1f8] sm:$0xff]
    %v180 = vld [vmem:[#allocation5 + $0x200] sm:$0xff]
    %v181 = vld [vmem:[#allocation5 + $0x208] sm:$0xff]
    %v182 = vld [vmem:[#allocation5 + $0x210] sm:$0xff]
    %v183 = vld [vmem:[#allocation5 + $0x218] sm:$0xff]
    %v184 = vld [vmem:[#allocation5 + $0x220] sm:$0xff]
    %v185 = vld [vmem:[#allocation5 + $0x228] sm:$0xff]
    %v186 = vld [vmem:[#allocation5 + $0x230] sm:$0xff]
    %v187 = vld [vmem:[#allocation5 + $0x238] sm:$0xff]
    %v188 = vld [vmem:[#allocation5 + $0x240] sm:$0xff]
    %v189 = vld [vmem:[#allocation5 + $0x248] sm:$0xff]
    %v190 = vld [vmem:[#allocation5 + $0x250] sm:$0xff]
    %v191 = vld [vmem:[#allocation5 + $0x258] sm:$0xff]
    %v192 = vld [vmem:[#allocation5 + $0x260] sm:$0xff]
    %v193 = vld [vmem:[#allocation5 + $0x268] sm:$0xff]
    %v194 = vld [vmem:[#allocation5 + $0x270] sm:$0xff]
    %v195 = vld [vmem:[#allocation5 + $0x278] sm:$0xff]
    %v196 = vld [vmem:[#allocation5 + $0x280] sm:$0xff]
    %v197 = vld [vmem:[#allocation5 + $0x288] sm:$0xff]
    %v198 = vld [vmem:[#allocation5 + $0x290] sm:$0xff]
    %v199 = vld [vmem:[#allocation5 + $0x298] sm:$0xff]
    %v200 = vld [vmem:[#allocation5 + $0x2a0] sm:$0xff]
    %v201 = vld [vmem:[#allocation5 + $0x2a8] sm:$0xff]
    %v202 = vld [vmem:[#allocation5 + $0x2b0] sm:$0xff]
    %v203 = vld [vmem:[#allocation5 + $0x2b8] sm:$0xff]
    %v204 = vld [vmem:[#allocation5 + $0x2c0] sm:$0xff]
    %v205 = vld [vmem:[#allocation5 + $0x2c8] sm:$0xff]
    %v206 = vld [vmem:[#allocation5 + $0x2d0] sm:$0xff]
    %v207 = vld [vmem:[#allocation5 + $0x2d8] sm:$0xff]
    %v208 = vld [vmem:[#allocation5 + $0x2e0] sm:$0xff]
    %v209 = vld [vmem:[#allocation5 + $0x2e8] sm:$0xff]
    %v210 = vld [vmem:[#allocation5 + $0x2f0] sm:$0xff]
    %v211 = vld [vmem:[#allocation5 + $0x2f8] sm:$0xff]
    %v212 = vld [vmem:[#allocation5 + $0x300] sm:$0xff]
    %v213 = vld [vmem:[#allocation5 + $0x308] sm:$0xff]
    %v214 = vld [vmem:[#allocation5 + $0x310] sm:$0xff]
    %v215 = vld [vmem:[#allocation5 + $0x318] sm:$0xff]
    %v216 = vld [vmem:[#allocation5 + $0x320] sm:$0xff]
    %v217 = vld [vmem:[#allocation5 + $0x328] sm:$0xff]
    %v218 = vld [vmem:[#allocation5 + $0x330] sm:$0xff]
    %v219 = vld [vmem:[#allocation5 + $0x338] sm:$0xff]
    %v220 = vld [vmem:[#allocation5 + $0x340] sm:$0xff]
    %v221 = vld [vmem:[#allocation5 + $0x348] sm:$0xff]
    %v222 = vld [vmem:[#allocation5 + $0x350] sm:$0xff]
    %v223 = vld [vmem:[#allocation5 + $0x358] sm:$0xff]
    %v224 = vld [vmem:[#allocation5 + $0x360] sm:$0xff]
    %v225 = vld [vmem:[#allocation5 + $0x368] sm:$0xff]
    %v226 = vld [vmem:[#allocation5 + $0x370] sm:$0xff]
    %v227 = vld [vmem:[#allocation5 + $0x378] sm:$0xff]
    %v228 = vld [vmem:[#allocation5 + $0x380] sm:$0xff]
    %v229 = vld [vmem:[#allocation5 + $0x388] sm:$0xff]
    %v230 = vld [vmem:[#allocation5 + $0x390] sm:$0xff]
    %v231 = vld [vmem:[#allocation5 + $0x398] sm:$0xff]
    %v232 = vld [vmem:[#allocation5 + $0x3a0] sm:$0xff]
    %v233 = vld [vmem:[#allocation5 + $0x3a8] sm:$0xff]
    %v234 = vld [vmem:[#allocation5 + $0x3b0] sm:$0xff]
    %v235 = vld [vmem:[#allocation5 + $0x3b8] sm:$0xff]
    %v236 = vld [vmem:[#allocation5 + $0x3c0] sm:$0xff]
    %v237 = vld [vmem:[#allocation5 + $0x3c8] sm:$0xff]
    %v238 = vld [vmem:[#allocation5 + $0x3d0] sm:$0xff]
    %v239 = vld [vmem:[#allocation5 + $0x3d8] sm:$0xff]
    %v240 = vld [vmem:[#allocation5 + $0x3e0] sm:$0xff]
    %v241 = vld [vmem:[#allocation5 + $0x3e8] sm:$0xff]
    %v242 = vld [vmem:[#allocation5 + $0x3f0] sm:$0xff]
    %v243 = vld [vmem:[#allocation5 + $0x3f8] sm:$0xff]
    %v244 = vld [vmem:[#allocation7] sm:$0xf]
    %v246 = vperm.slane %v244, 0
    %v247 = vperm.slane %v244, 1
    %v248 = vperm.slane %v244, 2
    %v249 = vperm.slane %v244, 3
    %255 = vst [vmem:[#allocation1] ss:$4 sm:$0xff] %v115
    %v256 = vld.sshfl [vmem:[#allocation1] sm:$0xff pattern:$0x73625140]
    %v257 = vld.sshfl [vmem:[#allocation1 + $0x8] sm:$0xff pattern:$0x73625140]
    %260 = vmatpush.msra.mxu0 %v176
    %261 = vmatpush.msra.mxu0 %v172
    %262 = vmatpush.msra.mxu0 %v168
    %263 = vmatpush.msra.mxu0 %v164
    %264 = vmatpush.msra.mxu0 %v160
    %265 = vmatpush.msra.mxu0 %v156
    %266 = vmatpush.msra.mxu0 %v152
    %267 = vmatpush.msra.mxu0 %v148
    %268 = vmatpush.msra.mxu0 %v144
    %269 = vmatpush.msra.mxu0 %v140
    %270 = vmatpush.msra.mxu0 %v136
    %271 = vmatpush.msra.mxu0 %v132
    %272 = vmatpush.msra.mxu0 %v128
    %273 = vmatpush.msra.mxu0 %v124
    %274 = vmatpush.msra.mxu0 %v120
    %275 = vmatpush.msra.mxu0 %v116
    %276 = vmatmul.f32.gmra.mxu0 %v256
    %v277 = vpop.f32.mrf.mxu0
    %v278 = vadd.f32 %v246, %v277
    %279 = vdwg.mxu0
    %280 = vmatpush.msra.mxu0 %v240
    %281 = vmatpush.msra.mxu0 %v236
    %282 = vmatpush.msra.mxu0 %v232
    %283 = vmatpush.msra.mxu0 %v228
    %284 = vmatpush.msra.mxu0 %v224
    %285 = vmatpush.msra.mxu0 %v220
    %286 = vmatpush.msra.mxu0 %v216
    %287 = vmatpush.msra.mxu0 %v212
    %288 = vmatpush.msra.mxu0 %v208
    %289 = vmatpush.msra.mxu0 %v204
    %290 = vmatpush.msra.mxu0 %v200
    %291 = vmatpush.msra.mxu0 %v196
    %292 = vmatpush.msra.mxu0 %v192
    %293 = vmatpush.msra.mxu0 %v188
    %294 = vmatpush.msra.mxu0 %v184
    %295 = vmatpush.msra.mxu0 %v180
    %296 = vmatmul.f32.gmra.mxu0 %v257
    %v297 = vpop.f32.mrf.mxu0
    %v298 = vadd.f32 %v278, %v297
    %299 = vdwg.mxu0
    %300 = vmatpush.msra.mxu0 %v177
    %301 = vmatpush.msra.mxu0 %v173
    %302 = vmatpush.msra.mxu0 %v169
    %303 = vmatpush.msra.mxu0 %v165
    %304 = vmatpush.msra.mxu0 %v161
    %305 = vmatpush.msra.mxu0 %v157
    %306 = vmatpush.msra.mxu0 %v153
    %307 = vmatpush.msra.mxu0 %v149
    %308 = vmatpush.msra.mxu0 %v145
    %309 = vmatpush.msra.mxu0 %v141
    %310 = vmatpush.msra.mxu0 %v137
    %311 = vmatpush.msra.mxu0 %v133
    %312 = vmatpush.msra.mxu0 %v129
    %313 = vmatpush.msra.mxu0 %v125
    %314 = vmatpush.msra.mxu0 %v121
    %315 = vmatpush.msra.mxu0 %v117
    %316 = vmatmul.f32.gmra.mxu0 %v256
    %v317 = vpop.f32.mrf.mxu0
    %v318 = vadd.f32 %v247, %v317
    %319 = vdwg.mxu0
    %320 = vmatpush.msra.mxu0 %v241
    %321 = vmatpush.msra.mxu0 %v237
    %322 = vmatpush.msra.mxu0 %v233
    %323 = vmatpush.msra.mxu0 %v229
    %324 = vmatpush.msra.mxu0 %v225
    %325 = vmatpush.msra.mxu0 %v221
    %326 = vmatpush.msra.mxu0 %v217
    %327 = vmatpush.msra.mxu0 %v213
    %328 = vmatpush.msra.mxu0 %v209
    %329 = vmatpush.msra.mxu0 %v205
    %330 = vmatpush.msra.mxu0 %v201
    %331 = vmatpush.msra.mxu0 %v197
    %332 = vmatpush.msra.mxu0 %v193
    %333 = vmatpush.msra.mxu0 %v189
    %334 = vmatpush.msra.mxu0 %v185
    %335 = vmatpush.msra.mxu0 %v181
    %336 = vmatmul.f32.gmra.mxu0 %v257
    %v337 = vpop.f32.mrf.mxu0
    %v338 = vadd.f32 %v318, %v337
    %339 = vdwg.mxu0
    %340 = vmatpush.msra.mxu0 %v178
    %341 = vmatpush.msra.mxu0 %v174
    %342 = vmatpush.msra.mxu0 %v170
    %343 = vmatpush.msra.mxu0 %v166
    %344 = vmatpush.msra.mxu0 %v162
    %345 = vmatpush.msra.mxu0 %v158
    %346 = vmatpush.msra.mxu0 %v154
    %347 = vmatpush.msra.mxu0 %v150
    %348 = vmatpush.msra.mxu0 %v146
    %349 = vmatpush.msra.mxu0 %v142
    %350 = vmatpush.msra.mxu0 %v138
    %351 = vmatpush.msra.mxu0 %v134
    %352 = vmatpush.msra.mxu0 %v130
    %353 = vmatpush.msra.mxu0 %v126
    %354 = vmatpush.msra.mxu0 %v122
    %355 = vmatpush.msra.mxu0 %v118
    %356 = vmatmul.f32.gmra.mxu0 %v256
    %v357 = vpop.f32.mrf.mxu0
    %v358 = vadd.f32 %v248, %v357
    %359 = vdwg.mxu0
    %360 = vmatpush.msra.mxu0 %v242
    %361 = vmatpush.msra.mxu0 %v238
    %362 = vmatpush.msra.mxu0 %v234
    %363 = vmatpush.msra.mxu0 %v230
    %364 = vmatpush.msra.mxu0 %v226
    %365 = vmatpush.msra.mxu0 %v222
    %366 = vmatpush.msra.mxu0 %v218
    %367 = vmatpush.msra.mxu0 %v214
    %368 = vmatpush.msra.mxu0 %v210
    %369 = vmatpush.msra.mxu0 %v206
    %370 = vmatpush.msra.mxu0 %v202
    %371 = vmatpush.msra.mxu0 %v198
    %372 = vmatpush.msra.mxu0 %v194
    %373 = vmatpush.msra.mxu0 %v190
    %374 = vmatpush.msra.mxu0 %v186
    %375 = vmatpush.msra.mxu0 %v182
    %376 = vmatmul.f32.gmra.mxu0 %v257
    %v377 = vpop.f32.mrf.mxu0
    %v378 = vadd.f32 %v358, %v377
    %379 = vdwg.mxu0
    %380 = vmatpush.msra.mxu0 %v179
    %381 = vmatpush.msra.mxu0 %v175
    %382 = vmatpush.msra.mxu0 %v171
    %383 = vmatpush.msra.mxu0 %v167
    %384 = vmatpush.msra.mxu0 %v163
    %385 = vmatpush.msra.mxu0 %v159
    %386 = vmatpush.msra.mxu0 %v155
    %387 = vmatpush.msra.mxu0 %v151
    %388 = vmatpush.msra.mxu0 %v147
    %389 = vmatpush.msra.mxu0 %v143
    %390 = vmatpush.msra.mxu0 %v139
    %391 = vmatpush.msra.mxu0 %v135
    %392 = vmatpush.msra.mxu0 %v131
    %393 = vmatpush.msra.mxu0 %v127
    %394 = vmatpush.msra.mxu0 %v123
    %395 = vmatpush.msra.mxu0 %v119
    %396 = vmatmul.f32.gmra.mxu0 %v256
    %v397 = vpop.f32.mrf.mxu0
    %v398 = vadd.f32 %v249, %v397
    %399 = vdwg.mxu0
    %400 = vmatpush.msra.mxu0 %v243
    %401 = vmatpush.msra.mxu0 %v239
    %402 = vmatpush.msra.mxu0 %v235
    %403 = vmatpush.msra.mxu0 %v231
    %404 = vmatpush.msra.mxu0 %v227
    %405 = vmatpush.msra.mxu0 %v223
    %406 = vmatpush.msra.mxu0 %v219
    %407 = vmatpush.msra.mxu0 %v215
    %408 = vmatpush.msra.mxu0 %v211
    %409 = vmatpush.msra.mxu0 %v207
    %410 = vmatpush.msra.mxu0 %v203
    %411 = vmatpush.msra.mxu0 %v199
    %412 = vmatpush.msra.mxu0 %v195
    %413 = vmatpush.msra.mxu0 %v191
    %414 = vmatpush.msra.mxu0 %v187
    %415 = vmatpush.msra.mxu0 %v183
    %416 = vmatmul.f32.gmra.mxu0 %v257
    %v417 = vpop.f32.mrf.mxu0
    %v418 = vadd.f32 %v398, %v417
    %419 = vdwg.mxu0
    %v420 = vmax.f32 %v298, 0.0
    %v421 = vmax.f32 %v338, 0.0
    %v422 = vmax.f32 %v378, 0.0
    %v423 = vmax.f32 %v418, 0.0
    %v424 = vld [vmem:[#allocation8] sm:$0xff]
    %v425 = vld [vmem:[#allocation8 + $0x8] sm:$0xff]
    %v426 = vld [vmem:[#allocation8 + $0x10] sm:$0xff]
    %v427 = vld [vmem:[#allocation8 + $0x18] sm:$0xff]
    %v428 = vld [vmem:[#allocation8 + $0x20] sm:$0xff]
    %v429 = vld [vmem:[#allocation8 + $0x28] sm:$0xff]
    %v430 = vld [vmem:[#allocation8 + $0x30] sm:$0xff]
    %v431 = vld [vmem:[#allocation8 + $0x38] sm:$0xff]
    %v432 = vld [vmem:[#allocation8 + $0x40] sm:$0xff]
    %v433 = vld [vmem:[#allocation8 + $0x48] sm:$0xff]
    %v434 = vld [vmem:[#allocation8 + $0x50] sm:$0xff]
    %v435 = vld [vmem:[#allocation8 + $0x58] sm:$0xff]
    %v436 = vld [vmem:[#allocation8 + $0x60] sm:$0xff]
    %v437 = vld [vmem:[#allocation8 + $0x68] sm:$0xff]
    %v438 = vld [vmem:[#allocation8 + $0x70] sm:$0xff]
    %v439 = vld [vmem:[#allocation8 + $0x78] sm:$0xff]
    %v440 = vld [vmem:[#allocation8 + $0x80] sm:$0xff]
    %v441 = vld [vmem:[#allocation8 + $0x88] sm:$0xff]
    %v442 = vld [vmem:[#allocation8 + $0x90] sm:$0xff]
    %v443 = vld [vmem:[#allocation8 + $0x98] sm:$0xff]
    %v444 = vld [vmem:[#allocation8 + $0xa0] sm:$0xff]
    %v445 = vld [vmem:[#allocation8 + $0xa8] sm:$0xff]
    %v446 = vld [vmem:[#allocation8 + $0xb0] sm:$0xff]
    %v447 = vld [vmem:[#allocation8 + $0xb8] sm:$0xff]
    %v448 = vld [vmem:[#allocation8 + $0xc0] sm:$0xff]
    %v449 = vld [vmem:[#allocation8 + $0xc8] sm:$0xff]
    %v450 = vld [vmem:[#allocation8 + $0xd0] sm:$0xff]
    %v451 = vld [vmem:[#allocation8 + $0xd8] sm:$0xff]
    %v452 = vld [vmem:[#allocation8 + $0xe0] sm:$0xff]
    %v453 = vld [vmem:[#allocation8 + $0xe8] sm:$0xff]
    %v454 = vld [vmem:[#allocation8 + $0xf0] sm:$0xff]
    %v455 = vld [vmem:[#allocation8 + $0xf8] sm:$0xff]
    %v456 = vld [vmem:[#allocation8 + $0x100] sm:$0xff]
    %v457 = vld [vmem:[#allocation8 + $0x108] sm:$0xff]
    %v458 = vld [vmem:[#allocation8 + $0x110] sm:$0xff]
    %v459 = vld [vmem:[#allocation8 + $0x118] sm:$0xff]
    %v460 = vld [vmem:[#allocation8 + $0x120] sm:$0xff]
    %v461 = vld [vmem:[#allocation8 + $0x128] sm:$0xff]
    %v462 = vld [vmem:[#allocation8 + $0x130] sm:$0xff]
    %v463 = vld [vmem:[#allocation8 + $0x138] sm:$0xff]
    %v464 = vld [vmem:[#allocation8 + $0x140] sm:$0xff]
    %v465 = vld [vmem:[#allocation8 + $0x148] sm:$0xff]
    %v466 = vld [vmem:[#allocation8 + $0x150] sm:$0xff]
    %v467 = vld [vmem:[#allocation8 + $0x158] sm:$0xff]
    %v468 = vld [vmem:[#allocation8 + $0x160] sm:$0xff]
    %v469 = vld [vmem:[#allocation8 + $0x168] sm:$0xff]
    %v470 = vld [vmem:[#allocation8 + $0x170] sm:$0xff]
    %v471 = vld [vmem:[#allocation8 + $0x178] sm:$0xff]
    %v472 = vld [vmem:[#allocation8 + $0x180] sm:$0xff]
    %v473 = vld [vmem:[#allocation8 + $0x188] sm:$0xff]
    %v474 = vld [vmem:[#allocation8 + $0x190] sm:$0xff]
    %v475 = vld [vmem:[#allocation8 + $0x198] sm:$0xff]
    %v476 = vld [vmem:[#allocation8 + $0x1a0] sm:$0xff]
    %v477 = vld [vmem:[#allocation8 + $0x1a8] sm:$0xff]
    %v478 = vld [vmem:[#allocation8 + $0x1b0] sm:$0xff]
    %v479 = vld [vmem:[#allocation8 + $0x1b8] sm:$0xff]
    %v480 = vld [vmem:[#allocation8 + $0x1c0] sm:$0xff]
    %v481 = vld [vmem:[#allocation8 + $0x1c8] sm:$0xff]
    %v482 = vld [vmem:[#allocation8 + $0x1d0] sm:$0xff]
    %v483 = vld [vmem:[#allocation8 + $0x1d8] sm:$0xff]
    %v484 = vld [vmem:[#allocation8 + $0x1e0] sm:$0xff]
    %v485 = vld [vmem:[#allocation8 + $0x1e8] sm:$0xff]
    %v486 = vld [vmem:[#allocation8 + $0x1f0] sm:$0xff]
    %v487 = vld [vmem:[#allocation8 + $0x1f8] sm:$0xff]
    %v488 = vld [vmem:[#allocation8 + $0x200] sm:$0xff]
    %v489 = vld [vmem:[#allocation8 + $0x208] sm:$0xff]
    %v490 = vld [vmem:[#allocation8 + $0x210] sm:$0xff]
    %v491 = vld [vmem:[#allocation8 + $0x218] sm:$0xff]
    %v492 = vld [vmem:[#allocation8 + $0x220] sm:$0xff]
    %v493 = vld [vmem:[#allocation8 + $0x228] sm:$0xff]
    %v494 = vld [vmem:[#allocation8 + $0x230] sm:$0xff]
    %v495 = vld [vmem:[#allocation8 + $0x238] sm:$0xff]
    %v496 = vld [vmem:[#allocation8 + $0x240] sm:$0xff]
    %v497 = vld [vmem:[#allocation8 + $0x248] sm:$0xff]
    %v498 = vld [vmem:[#allocation8 + $0x250] sm:$0xff]
    %v499 = vld [vmem:[#allocation8 + $0x258] sm:$0xff]
    %v500 = vld [vmem:[#allocation8 + $0x260] sm:$0xff]
    %v501 = vld [vmem:[#allocation8 + $0x268] sm:$0xff]
    %v502 = vld [vmem:[#allocation8 + $0x270] sm:$0xff]
    %v503 = vld [vmem:[#allocation8 + $0x278] sm:$0xff]
    %v504 = vld [vmem:[#allocation8 + $0x280] sm:$0xff]
    %v505 = vld [vmem:[#allocation8 + $0x288] sm:$0xff]
    %v506 = vld [vmem:[#allocation8 + $0x290] sm:$0xff]
    %v507 = vld [vmem:[#allocation8 + $0x298] sm:$0xff]
    %v508 = vld [vmem:[#allocation8 + $0x2a0] sm:$0xff]
    %v509 = vld [vmem:[#allocation8 + $0x2a8] sm:$0xff]
    %v510 = vld [vmem:[#allocation8 + $0x2b0] sm:$0xff]
    %v511 = vld [vmem:[#allocation8 + $0x2b8] sm:$0xff]
    %v512 = vld [vmem:[#allocation8 + $0x2c0] sm:$0xff]
    %v513 = vld [vmem:[#allocation8 + $0x2c8] sm:$0xff]
    %v514 = vld [vmem:[#allocation8 + $0x2d0] sm:$0xff]
    %v515 = vld [vmem:[#allocation8 + $0x2d8] sm:$0xff]
    %v516 = vld [vmem:[#allocation8 + $0x2e0] sm:$0xff]
    %v517 = vld [vmem:[#allocation8 + $0x2e8] sm:$0xff]
    %v518 = vld [vmem:[#allocation8 + $0x2f0] sm:$0xff]
    %v519 = vld [vmem:[#allocation8 + $0x2f8] sm:$0xff]
    %v520 = vld [vmem:[#allocation8 + $0x300] sm:$0xff]
    %v521 = vld [vmem:[#allocation8 + $0x308] sm:$0xff]
    %v522 = vld [vmem:[#allocation8 + $0x310] sm:$0xff]
    %v523 = vld [vmem:[#allocation8 + $0x318] sm:$0xff]
    %v524 = vld [vmem:[#allocation8 + $0x320] sm:$0xff]
    %v525 = vld [vmem:[#allocation8 + $0x328] sm:$0xff]
    %v526 = vld [vmem:[#allocation8 + $0x330] sm:$0xff]
    %v527 = vld [vmem:[#allocation8 + $0x338] sm:$0xff]
    %v528 = vld [vmem:[#allocation8 + $0x340] sm:$0xff]
    %v529 = vld [vmem:[#allocation8 + $0x348] sm:$0xff]
    %v530 = vld [vmem:[#allocation8 + $0x350] sm:$0xff]
    %v531 = vld [vmem:[#allocation8 + $0x358] sm:$0xff]
    %v532 = vld [vmem:[#allocation8 + $0x360] sm:$0xff]
    %v533 = vld [vmem:[#allocation8 + $0x368] sm:$0xff]
    %v534 = vld [vmem:[#allocation8 + $0x370] sm:$0xff]
    %v535 = vld [vmem:[#allocation8 + $0x378] sm:$0xff]
    %v536 = vld [vmem:[#allocation8 + $0x380] sm:$0xff]
    %v537 = vld [vmem:[#allocation8 + $0x388] sm:$0xff]
    %v538 = vld [vmem:[#allocation8 + $0x390] sm:$0xff]
    %v539 = vld [vmem:[#allocation8 + $0x398] sm:$0xff]
    %v540 = vld [vmem:[#allocation8 + $0x3a0] sm:$0xff]
    %v541 = vld [vmem:[#allocation8 + $0x3a8] sm:$0xff]
    %v542 = vld [vmem:[#allocation8 + $0x3b0] sm:$0xff]
    %v543 = vld [vmem:[#allocation8 + $0x3b8] sm:$0xff]
    %v544 = vld [vmem:[#allocation8 + $0x3c0] sm:$0xff]
    %v545 = vld [vmem:[#allocation8 + $0x3c8] sm:$0xff]
    %v546 = vld [vmem:[#allocation8 + $0x3d0] sm:$0xff]
    %v547 = vld [vmem:[#allocation8 + $0x3d8] sm:$0xff]
    %v548 = vld [vmem:[#allocation8 + $0x3e0] sm:$0xff]
    %v549 = vld [vmem:[#allocation8 + $0x3e8] sm:$0xff]
    %v550 = vld [vmem:[#allocation8 + $0x3f0] sm:$0xff]
    %v551 = vld [vmem:[#allocation8 + $0x3f8] sm:$0xff]
    %v552 = vld [vmem:[#allocation8 + $0x400] sm:$0xff]
    %v553 = vld [vmem:[#allocation8 + $0x408] sm:$0xff]
    %v554 = vld [vmem:[#allocation8 + $0x410] sm:$0xff]
    %v555 = vld [vmem:[#allocation8 + $0x418] sm:$0xff]
    %v556 = vld [vmem:[#allocation8 + $0x420] sm:$0xff]
    %v557 = vld [vmem:[#allocation8 + $0x428] sm:$0xff]
    %v558 = vld [vmem:[#allocation8 + $0x430] sm:$0xff]
    %v559 = vld [vmem:[#allocation8 + $0x438] sm:$0xff]
    %v560 = vld [vmem:[#allocation8 + $0x440] sm:$0xff]
    %v561 = vld [vmem:[#allocation8 + $0x448] sm:$0xff]
    %v562 = vld [vmem:[#allocation8 + $0x450] sm:$0xff]
    %v563 = vld [vmem:[#allocation8 + $0x458] sm:$0xff]
    %v564 = vld [vmem:[#allocation8 + $0x460] sm:$0xff]
    %v565 = vld [vmem:[#allocation8 + $0x468] sm:$0xff]
    %v566 = vld [vmem:[#allocation8 + $0x470] sm:$0xff]
    %v567 = vld [vmem:[#allocation8 + $0x478] sm:$0xff]
    %v568 = vld [vmem:[#allocation8 + $0x480] sm:$0xff]
    %v569 = vld [vmem:[#allocation8 + $0x488] sm:$0xff]
    %v570 = vld [vmem:[#allocation8 + $0x490] sm:$0xff]
    %v571 = vld [vmem:[#allocation8 + $0x498] sm:$0xff]
    %v572 = vld [vmem:[#allocation8 + $0x4a0] sm:$0xff]
    %v573 = vld [vmem:[#allocation8 + $0x4a8] sm:$0xff]
    %v574 = vld [vmem:[#allocation8 + $0x4b0] sm:$0xff]
    %v575 = vld [vmem:[#allocation8 + $0x4b8] sm:$0xff]
    %v576 = vld [vmem:[#allocation8 + $0x4c0] sm:$0xff]
    %v577 = vld [vmem:[#allocation8 + $0x4c8] sm:$0xff]
    %v578 = vld [vmem:[#allocation8 + $0x4d0] sm:$0xff]
    %v579 = vld [vmem:[#allocation8 + $0x4d8] sm:$0xff]
    %v580 = vld [vmem:[#allocation8 + $0x4e0] sm:$0xff]
    %v581 = vld [vmem:[#allocation8 + $0x4e8] sm:$0xff]
    %v582 = vld [vmem:[#allocation8 + $0x4f0] sm:$0xff]
    %v583 = vld [vmem:[#allocation8 + $0x4f8] sm:$0xff]
    %v584 = vld [vmem:[#allocation8 + $0x500] sm:$0xff]
    %v585 = vld [vmem:[#allocation8 + $0x508] sm:$0xff]
    %v586 = vld [vmem:[#allocation8 + $0x510] sm:$0xff]
    %v587 = vld [vmem:[#allocation8 + $0x518] sm:$0xff]
    %v588 = vld [vmem:[#allocation8 + $0x520] sm:$0xff]
    %v589 = vld [vmem:[#allocation8 + $0x528] sm:$0xff]
    %v590 = vld [vmem:[#allocation8 + $0x530] sm:$0xff]
    %v591 = vld [vmem:[#allocation8 + $0x538] sm:$0xff]
    %v592 = vld [vmem:[#allocation8 + $0x540] sm:$0xff]
    %v593 = vld [vmem:[#allocation8 + $0x548] sm:$0xff]
    %v594 = vld [vmem:[#allocation8 + $0x550] sm:$0xff]
    %v595 = vld [vmem:[#allocation8 + $0x558] sm:$0xff]
    %v596 = vld [vmem:[#allocation8 + $0x560] sm:$0xff]
    %v597 = vld [vmem:[#allocation8 + $0x568] sm:$0xff]
    %v598 = vld [vmem:[#allocation8 + $0x570] sm:$0xff]
    %v599 = vld [vmem:[#allocation8 + $0x578] sm:$0xff]
    %v600 = vld [vmem:[#allocation8 + $0x580] sm:$0xff]
    %v601 = vld [vmem:[#allocation8 + $0x588] sm:$0xff]
    %v602 = vld [vmem:[#allocation8 + $0x590] sm:$0xff]
    %v603 = vld [vmem:[#allocation8 + $0x598] sm:$0xff]
    %v604 = vld [vmem:[#allocation8 + $0x5a0] sm:$0xff]
    %v605 = vld [vmem:[#allocation8 + $0x5a8] sm:$0xff]
    %v606 = vld [vmem:[#allocation8 + $0x5b0] sm:$0xff]
    %v607 = vld [vmem:[#allocation8 + $0x5b8] sm:$0xff]
    %v608 = vld [vmem:[#allocation8 + $0x5c0] sm:$0xff]
    %v609 = vld [vmem:[#allocation8 + $0x5c8] sm:$0xff]
    %v610 = vld [vmem:[#allocation8 + $0x5d0] sm:$0xff]
    %v611 = vld [vmem:[#allocation8 + $0x5d8] sm:$0xff]
    %v612 = vld [vmem:[#allocation8 + $0x5e0] sm:$0xff]
    %v613 = vld [vmem:[#allocation8 + $0x5e8] sm:$0xff]
    %v614 = vld [vmem:[#allocation8 + $0x5f0] sm:$0xff]
    %v615 = vld [vmem:[#allocation8 + $0x5f8] sm:$0xff]
    %v616 = vld [vmem:[#allocation8 + $0x600] sm:$0xff]
    %v617 = vld [vmem:[#allocation8 + $0x608] sm:$0xff]
    %v618 = vld [vmem:[#allocation8 + $0x610] sm:$0xff]
    %v619 = vld [vmem:[#allocation8 + $0x618] sm:$0xff]
    %v620 = vld [vmem:[#allocation8 + $0x620] sm:$0xff]
    %v621 = vld [vmem:[#allocation8 + $0x628] sm:$0xff]
    %v622 = vld [vmem:[#allocation8 + $0x630] sm:$0xff]
    %v623 = vld [vmem:[#allocation8 + $0x638] sm:$0xff]
    %v624 = vld [vmem:[#allocation8 + $0x640] sm:$0xff]
    %v625 = vld [vmem:[#allocation8 + $0x648] sm:$0xff]
    %v626 = vld [vmem:[#allocation8 + $0x650] sm:$0xff]
    %v627 = vld [vmem:[#allocation8 + $0x658] sm:$0xff]
    %v628 = vld [vmem:[#allocation8 + $0x660] sm:$0xff]
    %v629 = vld [vmem:[#allocation8 + $0x668] sm:$0xff]
    %v630 = vld [vmem:[#allocation8 + $0x670] sm:$0xff]
    %v631 = vld [vmem:[#allocation8 + $0x678] sm:$0xff]
    %v632 = vld [vmem:[#allocation8 + $0x680] sm:$0xff]
    %v633 = vld [vmem:[#allocation8 + $0x688] sm:$0xff]
    %v634 = vld [vmem:[#allocation8 + $0x690] sm:$0xff]
    %v635 = vld [vmem:[#allocation8 + $0x698] sm:$0xff]
    %v636 = vld [vmem:[#allocation8 + $0x6a0] sm:$0xff]
    %v637 = vld [vmem:[#allocation8 + $0x6a8] sm:$0xff]
    %v638 = vld [vmem:[#allocation8 + $0x6b0] sm:$0xff]
    %v639 = vld [vmem:[#allocation8 + $0x6b8] sm:$0xff]
    %v640 = vld [vmem:[#allocation8 + $0x6c0] sm:$0xff]
    %v641 = vld [vmem:[#allocation8 + $0x6c8] sm:$0xff]
    %v642 = vld [vmem:[#allocation8 + $0x6d0] sm:$0xff]
    %v643 = vld [vmem:[#allocation8 + $0x6d8] sm:$0xff]
    %v644 = vld [vmem:[#allocation8 + $0x6e0] sm:$0xff]
    %v645 = vld [vmem:[#allocation8 + $0x6e8] sm:$0xff]
    %v646 = vld [vmem:[#allocation8 + $0x6f0] sm:$0xff]
    %v647 = vld [vmem:[#allocation8 + $0x6f8] sm:$0xff]
    %v648 = vld [vmem:[#allocation8 + $0x700] sm:$0xff]
    %v649 = vld [vmem:[#allocation8 + $0x708] sm:$0xff]
    %v650 = vld [vmem:[#allocation8 + $0x710] sm:$0xff]
    %v651 = vld [vmem:[#allocation8 + $0x718] sm:$0xff]
    %v652 = vld [vmem:[#allocation8 + $0x720] sm:$0xff]
    %v653 = vld [vmem:[#allocation8 + $0x728] sm:$0xff]
    %v654 = vld [vmem:[#allocation8 + $0x730] sm:$0xff]
    %v655 = vld [vmem:[#allocation8 + $0x738] sm:$0xff]
    %v656 = vld [vmem:[#allocation8 + $0x740] sm:$0xff]
    %v657 = vld [vmem:[#allocation8 + $0x748] sm:$0xff]
    %v658 = vld [vmem:[#allocation8 + $0x750] sm:$0xff]
    %v659 = vld [vmem:[#allocation8 + $0x758] sm:$0xff]
    %v660 = vld [vmem:[#allocation8 + $0x760] sm:$0xff]
    %v661 = vld [vmem:[#allocation8 + $0x768] sm:$0xff]
    %v662 = vld [vmem:[#allocation8 + $0x770] sm:$0xff]
    %v663 = vld [vmem:[#allocation8 + $0x778] sm:$0xff]
    %v664 = vld [vmem:[#allocation8 + $0x780] sm:$0xff]
    %v665 = vld [vmem:[#allocation8 + $0x788] sm:$0xff]
    %v666 = vld [vmem:[#allocation8 + $0x790] sm:$0xff]
    %v667 = vld [vmem:[#allocation8 + $0x798] sm:$0xff]
    %v668 = vld [vmem:[#allocation8 + $0x7a0] sm:$0xff]
    %v669 = vld [vmem:[#allocation8 + $0x7a8] sm:$0xff]
    %v670 = vld [vmem:[#allocation8 + $0x7b0] sm:$0xff]
    %v671 = vld [vmem:[#allocation8 + $0x7b8] sm:$0xff]
    %v672 = vld [vmem:[#allocation8 + $0x7c0] sm:$0xff]
    %v673 = vld [vmem:[#allocation8 + $0x7c8] sm:$0xff]
    %v674 = vld [vmem:[#allocation8 + $0x7d0] sm:$0xff]
    %v675 = vld [vmem:[#allocation8 + $0x7d8] sm:$0xff]
    %v676 = vld [vmem:[#allocation8 + $0x7e0] sm:$0xff]
    %v677 = vld [vmem:[#allocation8 + $0x7e8] sm:$0xff]
    %v678 = vld [vmem:[#allocation8 + $0x7f0] sm:$0xff]
    %v679 = vld [vmem:[#allocation8 + $0x7f8] sm:$0xff]
    %v680 = vld [vmem:[#allocation10] sm:$0xf]
    %v682 = vperm.slane %v680, 0
    %v683 = vperm.slane %v680, 1
    %v684 = vperm.slane %v680, 2
    %v685 = vperm.slane %v680, 3
    %690 = vmatpush.msra.mxu0 %v484
    %691 = vmatpush.msra.mxu0 %v480
    %692 = vmatpush.msra.mxu0 %v476
    %693 = vmatpush.msra.mxu0 %v472
    %694 = vmatpush.msra.mxu0 %v468
    %695 = vmatpush.msra.mxu0 %v464
    %696 = vmatpush.msra.mxu0 %v460
    %697 = vmatpush.msra.mxu0 %v456
    %698 = vmatpush.msra.mxu0 %v452
    %699 = vmatpush.msra.mxu0 %v448
    %700 = vmatpush.msra.mxu0 %v444
    %701 = vmatpush.msra.mxu0 %v440
    %702 = vmatpush.msra.mxu0 %v436
    %703 = vmatpush.msra.mxu0 %v432
    %704 = vmatpush.msra.mxu0 %v428
    %705 = vmatpush.msra.mxu0 %v424
    %706 = vmatmul.f32.gmra.mxu0 %v420
    %v707 = vpop.f32.mrf.mxu0
    %v708 = vadd.f32 %v682, %v707
    %709 = vdwg.mxu0
    %710 = vmatpush.msra.mxu0 %v548
    %711 = vmatpush.msra.mxu0 %v544
    %712 = vmatpush.msra.mxu0 %v540
    %713 = vmatpush.msra.mxu0 %v536
    %714 = vmatpush.msra.mxu0 %v532
    %715 = vmatpush.msra.mxu0 %v528
    %716 = vmatpush.msra.mxu0 %v524
    %717 = vmatpush.msra.mxu0 %v520
    %718 = vmatpush.msra.mxu0 %v516
    %719 = vmatpush.msra.mxu0 %v512
    %720 = vmatpush.msra.mxu0 %v508
    %721 = vmatpush.msra.mxu0 %v504
    %722 = vmatpush.msra.mxu0 %v500
    %723 = vmatpush.msra.mxu0 %v496
    %724 = vmatpush.msra.mxu0 %v492
    %725 = vmatpush.msra.mxu0 %v488
    %726 = vmatmul.f32.gmra.mxu0 %v421
    %v727 = vpop.f32.mrf.mxu0
    %v728 = vadd.f32 %v708, %v727
    %729 = vdwg.mxu0
    %730 = vmatpush.msra.mxu0 %v612
    %731 = vmatpush.msra.mxu0 %v608
    %732 = vmatpush.msra.mxu0 %v604
    %733 = vmatpush.msra.mxu0 %v600
    %734 = vmatpush.msra.mxu0 %v596
    %735 = vmatpush.msra.mxu0 %v592
    %736 = vmatpush.msra.mxu0 %v588
    %737 = vmatpush.msra.mxu0 %v584
    %738 = vmatpush.msra.mxu0 %v580
    %739 = vmatpush.msra.mxu0 %v576
    %740 = vmatpush.msra.mxu0 %v572
    %741 = vmatpush.msra.mxu0 %v568
    %742 = vmatpush.msra.mxu0 %v564
    %743 = vmatpush.msra.mxu0 %v560
    %744 = vmatpush.msra.mxu0 %v556
    %745 = vmatpush.msra.mxu0 %v552
    %746 = vmatmul.f32.gmra.mxu0 %v422
    %v747 = vpop.f32.mrf.mxu0
    %v748 = vadd.f32 %v728, %v747
    %749 = vdwg.mxu0
    %750 = vmatpush.msra.mxu0 %v676
    %751 = vmatpush.msra.mxu0 %v672
    %752 = vmatpush.msra.mxu0 %v668
    %753 = vmatpush.msra.mxu0 %v664
    %754 = vmatpush.msra.mxu0 %v660
    %755 = vmatpush.msra.mxu0 %v656
    %756 = vmatpush.msra.mxu0 %v652
    %757 = vmatpush.msra.mxu0 %v648
    %758 = vmatpush.msra.mxu0 %v644
    %759 = vmatpush.msra.mxu0 %v640
    %760 = vmatpush.msra.mxu0 %v636
    %761 = vmatpush.msra.mxu0 %v632
    %762 = vmatpush.msra.mxu0 %v628
    %763 = vmatpush.msra.mxu0 %v624
    %764 = vmatpush.msra.mxu0 %v620
    %765 = vmatpush.msra.mxu0 %v616
    %766 = vmatmul.f32.gmra.mxu0 %v423
    %v767 = vpop.f32.mrf.mxu0
    %v768 = vadd.f32 %v748, %v767
    %769 = vdwg.mxu0
    %770 = vmatpush.msra.mxu0 %v485
    %771 = vmatpush.msra.mxu0 %v481
    %772 = vmatpush.msra.mxu0 %v477
    %773 = vmatpush.msra.mxu0 %v473
    %774 = vmatpush.msra.mxu0 %v469
    %775 = vmatpush.msra.mxu0 %v465
    %776 = vmatpush.msra.mxu0 %v461
    %777 = vmatpush.msra.mxu0 %v457
    %778 = vmatpush.msra.mxu0 %v453
    %779 = vmatpush.msra.mxu0 %v449
    %780 = vmatpush.msra.mxu0 %v445
    %781 = vmatpush.msra.mxu0 %v441
    %782 = vmatpush.msra.mxu0 %v437
    %783 = vmatpush.msra.mxu0 %v433
    %784 = vmatpush.msra.mxu0 %v429
    %785 = vmatpush.msra.mxu0 %v425
    %786 = vmatmul.f32.gmra.mxu0 %v420
    %v787 = vpop.f32.mrf.mxu0
    %v788 = vadd.f32 %v683, %v787
    %789 = vdwg.mxu0
    %790 = vmatpush.msra.mxu0 %v549
    %791 = vmatpush.msra.mxu0 %v545
    %792 = vmatpush.msra.mxu0 %v541
    %793 = vmatpush.msra.mxu0 %v537
    %794 = vmatpush.msra.mxu0 %v533
    %795 = vmatpush.msra.mxu0 %v529
    %796 = vmatpush.msra.mxu0 %v525
    %797 = vmatpush.msra.mxu0 %v521
    %798 = vmatpush.msra.mxu0 %v517
    %799 = vmatpush.msra.mxu0 %v513
    %800 = vmatpush.msra.mxu0 %v509
    %801 = vmatpush.msra.mxu0 %v505
    %802 = vmatpush.msra.mxu0 %v501
    %803 = vmatpush.msra.mxu0 %v497
    %804 = vmatpush.msra.mxu0 %v493
    %805 = vmatpush.msra.mxu0 %v489
    %806 = vmatmul.f32.gmra.mxu0 %v421
    %v807 = vpop.f32.mrf.mxu0
    %v808 = vadd.f32 %v788, %v807
    %809 = vdwg.mxu0
    %810 = vmatpush.msra.mxu0 %v613
    %811 = vmatpush.msra.mxu0 %v609
    %812 = vmatpush.msra.mxu0 %v605
    %813 = vmatpush.msra.mxu0 %v601
    %814 = vmatpush.msra.mxu0 %v597
    %815 = vmatpush.msra.mxu0 %v593
    %816 = vmatpush.msra.mxu0 %v589
    %817 = vmatpush.msra.mxu0 %v585
    %818 = vmatpush.msra.mxu0 %v581
    %819 = vmatpush.msra.mxu0 %v577
    %820 = vmatpush.msra.mxu0 %v573
    %821 = vmatpush.msra.mxu0 %v569
    %822 = vmatpush.msra.mxu0 %v565
    %823 = vmatpush.msra.mxu0 %v561
    %824 = vmatpush.msra.mxu0 %v557
    %825 = vmatpush.msra.mxu0 %v553
    %826 = vmatmul.f32.gmra.mxu0 %v422
    %v827 = vpop.f32.mrf.mxu0
    %v828 = vadd.f32 %v808, %v827
    %829 = vdwg.mxu0
    %830 = vmatpush.msra.mxu0 %v677
    %831 = vmatpush.msra.mxu0 %v673
    %832 = vmatpush.msra.mxu0 %v669
    %833 = vmatpush.msra.mxu0 %v665
    %834 = vmatpush.msra.mxu0 %v661
    %835 = vmatpush.msra.mxu0 %v657
    %836 = vmatpush.msra.mxu0 %v653
    %837 = vmatpush.msra.mxu0 %v649
    %838 = vmatpush.msra.mxu0 %v645
    %839 = vmatpush.msra.mxu0 %v641
    %840 = vmatpush.msra.mxu0 %v637
    %841 = vmatpush.msra.mxu0 %v633
    %842 = vmatpush.msra.mxu0 %v629
    %843 = vmatpush.msra.mxu0 %v625
    %844 = vmatpush.msra.mxu0 %v621
    %845 = vmatpush.msra.mxu0 %v617
    %846 = vmatmul.f32.gmra.mxu0 %v423
    %v847 = vpop.f32.mrf.mxu0
    %v848 = vadd.f32 %v828, %v847
    %849 = vdwg.mxu0
    %850 = vmatpush.msra.mxu0 %v486
    %851 = vmatpush.msra.mxu0 %v482
    %852 = vmatpush.msra.mxu0 %v478
    %853 = vmatpush.msra.mxu0 %v474
    %854 = vmatpush.msra.mxu0 %v470
    %855 = vmatpush.msra.mxu0 %v466
    %856 = vmatpush.msra.mxu0 %v462
    %857 = vmatpush.msra.mxu0 %v458
    %858 = vmatpush.msra.mxu0 %v454
    %859 = vmatpush.msra.mxu0 %v450
    %860 = vmatpush.msra.mxu0 %v446
    %861 = vmatpush.msra.mxu0 %v442
    %862 = vmatpush.msra.mxu0 %v438
    %863 = vmatpush.msra.mxu0 %v434
    %864 = vmatpush.msra.mxu0 %v430
    %865 = vmatpush.msra.mxu0 %v426
    %866 = vmatmul.f32.gmra.mxu0 %v420
    %v867 = vpop.f32.mrf.mxu0
    %v868 = vadd.f32 %v684, %v867
    %869 = vdwg.mxu0
    %870 = vmatpush.msra.mxu0 %v550
    %871 = vmatpush.msra.mxu0 %v546
    %872 = vmatpush.msra.mxu0 %v542
    %873 = vmatpush.msra.mxu0 %v538
    %874 = vmatpush.msra.mxu0 %v534
    %875 = vmatpush.msra.mxu0 %v530
    %876 = vmatpush.msra.mxu0 %v526
    %877 = vmatpush.msra.mxu0 %v522
    %878 = vmatpush.msra.mxu0 %v518
    %879 = vmatpush.msra.mxu0 %v514
    %880 = vmatpush.msra.mxu0 %v510
    %881 = vmatpush.msra.mxu0 %v506
    %882 = vmatpush.msra.mxu0 %v502
    %883 = vmatpush.msra.mxu0 %v498
    %884 = vmatpush.msra.mxu0 %v494
    %885 = vmatpush.msra.mxu0 %v490
    %886 = vmatmul.f32.gmra.mxu0 %v421
    %v887 = vpop.f32.mrf.mxu0
    %v888 = vadd.f32 %v868, %v887
    %889 = vdwg.mxu0
    %890 = vmatpush.msra.mxu0 %v614
    %891 = vmatpush.msra.mxu0 %v610
    %892 = vmatpush.msra.mxu0 %v606
    %893 = vmatpush.msra.mxu0 %v602
    %894 = vmatpush.msra.mxu0 %v598
    %895 = vmatpush.msra.mxu0 %v594
    %896 = vmatpush.msra.mxu0 %v590
    %897 = vmatpush.msra.mxu0 %v586
    %898 = vmatpush.msra.mxu0 %v582
    %899 = vmatpush.msra.mxu0 %v578
    %900 = vmatpush.msra.mxu0 %v574
    %901 = vmatpush.msra.mxu0 %v570
    %902 = vmatpush.msra.mxu0 %v566
    %903 = vmatpush.msra.mxu0 %v562
    %904 = vmatpush.msra.mxu0 %v558
    %905 = vmatpush.msra.mxu0 %v554
    %906 = vmatmul.f32.gmra.mxu0 %v422
    %v907 = vpop.f32.mrf.mxu0
    %v908 = vadd.f32 %v888, %v907
    %909 = vdwg.mxu0
    %910 = vmatpush.msra.mxu0 %v678
    %911 = vmatpush.msra.mxu0 %v674
    %912 = vmatpush.msra.mxu0 %v670
    %913 = vmatpush.msra.mxu0 %v666
    %914 = vmatpush.msra.mxu0 %v662
    %915 = vmatpush.msra.mxu0 %v658
    %916 = vmatpush.msra.mxu0 %v654
    %917 = vmatpush.msra.mxu0 %v650
    %918 = vmatpush.msra.mxu0 %v646
    %919 = vmatpush.msra.mxu0 %v642
    %920 = vmatpush.msra.mxu0 %v638
    %921 = vmatpush.msra.mxu0 %v634
    %922 = vmatpush.msra.mxu0 %v630
    %923 = vmatpush.msra.mxu0 %v626
    %924 = vmatpush.msra.mxu0 %v622
    %925 = vmatpush.msra.mxu0 %v618
    %926 = vmatmul.f32.gmra.mxu0 %v423
    %v927 = vpop.f32.mrf.mxu0
    %v928 = vadd.f32 %v908, %v927
    %929 = vdwg.mxu0
    %930 = vmatpush.msra.mxu0 %v487
    %931 = vmatpush.msra.mxu0 %v483
    %932 = vmatpush.msra.mxu0 %v479
    %933 = vmatpush.msra.mxu0 %v475
    %934 = vmatpush.msra.mxu0 %v471
    %935 = vmatpush.msra.mxu0 %v467
    %936 = vmatpush.msra.mxu0 %v463
    %937 = vmatpush.msra.mxu0 %v459
    %938 = vmatpush.msra.mxu0 %v455
    %939 = vmatpush.msra.mxu0 %v451
    %940 = vmatpush.msra.mxu0 %v447
    %941 = vmatpush.msra.mxu0 %v443
    %942 = vmatpush.msra.mxu0 %v439
    %943 = vmatpush.msra.mxu0 %v435
    %944 = vmatpush.msra.mxu0 %v431
    %945 = vmatpush.msra.mxu0 %v427
    %946 = vmatmul.f32.gmra.mxu0 %v420
    %v947 = vpop.f32.mrf.mxu0
    %v948 = vadd.f32 %v685, %v947
    %949 = vdwg.mxu0
    %950 = vmatpush.msra.mxu0 %v551
    %951 = vmatpush.msra.mxu0 %v547
    %952 = vmatpush.msra.mxu0 %v543
    %953 = vmatpush.msra.mxu0 %v539
    %954 = vmatpush.msra.mxu0 %v535
    %955 = vmatpush.msra.mxu0 %v531
    %956 = vmatpush.msra.mxu0 %v527
    %957 = vmatpush.msra.mxu0 %v523
    %958 = vmatpush.msra.mxu0 %v519
    %959 = vmatpush.msra.mxu0 %v515
    %960 = vmatpush.msra.mxu0 %v511
    %961 = vmatpush.msra.mxu0 %v507
    %962 = vmatpush.msra.mxu0 %v503
    %963 = vmatpush.msra.mxu0 %v499
    %964 = vmatpush.msra.mxu0 %v495
    %965 = vmatpush.msra.mxu0 %v491
    %966 = vmatmul.f32.gmra.mxu0 %v421
    %v967 = vpop.f32.mrf.mxu0
    %v968 = vadd.f32 %v948, %v967
    %969 = vdwg.mxu0
    %970 = vmatpush.msra.mxu0 %v615
    %971 = vmatpush.msra.mxu0 %v611
    %972 = vmatpush.msra.mxu0 %v607
    %973 = vmatpush.msra.mxu0 %v603
    %974 = vmatpush.msra.mxu0 %v599
    %975 = vmatpush.msra.mxu0 %v595
    %976 = vmatpush.msra.mxu0 %v591
    %977 = vmatpush.msra.mxu0 %v587
    %978 = vmatpush.msra.mxu0 %v583
    %979 = vmatpush.msra.mxu0 %v579
    %980 = vmatpush.msra.mxu0 %v575
    %981 = vmatpush.msra.mxu0 %v571
    %982 = vmatpush.msra.mxu0 %v567
    %983 = vmatpush.msra.mxu0 %v563
    %984 = vmatpush.msra.mxu0 %v559
    %985 = vmatpush.msra.mxu0 %v555
    %986 = vmatmul.f32.gmra.mxu0 %v422
    %v987 = vpop.f32.mrf.mxu0
    %v988 = vadd.f32 %v968, %v987
    %989 = vdwg.mxu0
    %990 = vmatpush.msra.mxu0 %v679
    %991 = vmatpush.msra.mxu0 %v675
    %992 = vmatpush.msra.mxu0 %v671
    %993 = vmatpush.msra.mxu0 %v667
    %994 = vmatpush.msra.mxu0 %v663
    %995 = vmatpush.msra.mxu0 %v659
    %996 = vmatpush.msra.mxu0 %v655
    %997 = vmatpush.msra.mxu0 %v651
    %998 = vmatpush.msra.mxu0 %v647
    %999 = vmatpush.msra.mxu0 %v643
    %1000 = vmatpush.msra.mxu0 %v639
    %1001 = vmatpush.msra.mxu0 %v635
    %1002 = vmatpush.msra.mxu0 %v631
    %1003 = vmatpush.msra.mxu0 %v627
    %1004 = vmatpush.msra.mxu0 %v623
    %1005 = vmatpush.msra.mxu0 %v619
    %1006 = vmatmul.f32.gmra.mxu0 %v423
    %v1007 = vpop.f32.mrf.mxu0
    %v1008 = vadd.f32 %v988, %v1007
    %1009 = vdwg.mxu0
    %v1010 = vmax.f32 %v768, 0.0
    %v1011 = vmax.f32 %v848, 0.0
    %v1012 = vmax.f32 %v928, 0.0
    %v1013 = vmax.f32 %v1008, 0.0
    %v1014 = vld [vmem:[#allocation11] sm:$0xff]
    %v1015 = vld [vmem:[#allocation11 + $0x8] sm:$0xff]
    %v1016 = vld [vmem:[#allocation11 + $0x10] sm:$0xff]
    %v1017 = vld [vmem:[#allocation11 + $0x18] sm:$0xff]
    %v1018 = vld [vmem:[#allocation11 + $0x20] sm:$0xff]
    %v1019 = vld [vmem:[#allocation11 + $0x28] sm:$0xff]
    %v1020 = vld [vmem:[#allocation11 + $0x30] sm:$0xff]
    %v1021 = vld [vmem:[#allocation11 + $0x38] sm:$0xff]
    %v1022 = vld [vmem:[#allocation11 + $0x40] sm:$0xff]
    %v1023 = vld [vmem:[#allocation11 + $0x48] sm:$0xff]
    %v1024 = vld [vmem:[#allocation11 + $0x50] sm:$0xff]
    %v1025 = vld [vmem:[#allocation11 + $0x58] sm:$0xff]
    %v1026 = vld [vmem:[#allocation11 + $0x60] sm:$0xff]
    %v1027 = vld [vmem:[#allocation11 + $0x68] sm:$0xff]
    %v1028 = vld [vmem:[#allocation11 + $0x70] sm:$0xff]
    %v1029 = vld [vmem:[#allocation11 + $0x78] sm:$0xff]
    %v1030 = vld [vmem:[#allocation11 + $0x80] sm:$0xff]
    %v1031 = vld [vmem:[#allocation11 + $0x88] sm:$0xff]
    %v1032 = vld [vmem:[#allocation11 + $0x90] sm:$0xff]
    %v1033 = vld [vmem:[#allocation11 + $0x98] sm:$0xff]
    %v1034 = vld [vmem:[#allocation11 + $0xa0] sm:$0xff]
    %v1035 = vld [vmem:[#allocation11 + $0xa8] sm:$0xff]
    %v1036 = vld [vmem:[#allocation11 + $0xb0] sm:$0xff]
    %v1037 = vld [vmem:[#allocation11 + $0xb8] sm:$0xff]
    %v1038 = vld [vmem:[#allocation11 + $0xc0] sm:$0xff]
    %v1039 = vld [vmem:[#allocation11 + $0xc8] sm:$0xff]
    %v1040 = vld [vmem:[#allocation11 + $0xd0] sm:$0xff]
    %v1041 = vld [vmem:[#allocation11 + $0xd8] sm:$0xff]
    %v1042 = vld [vmem:[#allocation11 + $0xe0] sm:$0xff]
    %v1043 = vld [vmem:[#allocation11 + $0xe8] sm:$0xff]
    %v1044 = vld [vmem:[#allocation11 + $0xf0] sm:$0xff]
    %v1045 = vld [vmem:[#allocation11 + $0xf8] sm:$0xff]
    %v1046 = vld [vmem:[#allocation11 + $0x100] sm:$0xff]
    %v1047 = vld [vmem:[#allocation11 + $0x108] sm:$0xff]
    %v1048 = vld [vmem:[#allocation11 + $0x110] sm:$0xff]
    %v1049 = vld [vmem:[#allocation11 + $0x118] sm:$0xff]
    %v1050 = vld [vmem:[#allocation11 + $0x120] sm:$0xff]
    %v1051 = vld [vmem:[#allocation11 + $0x128] sm:$0xff]
    %v1052 = vld [vmem:[#allocation11 + $0x130] sm:$0xff]
    %v1053 = vld [vmem:[#allocation11 + $0x138] sm:$0xff]
    %v1054 = vld [vmem:[#allocation11 + $0x140] sm:$0xff]
    %v1055 = vld [vmem:[#allocation11 + $0x148] sm:$0xff]
    %v1056 = vld [vmem:[#allocation11 + $0x150] sm:$0xff]
    %v1057 = vld [vmem:[#allocation11 + $0x158] sm:$0xff]
    %v1058 = vld [vmem:[#allocation11 + $0x160] sm:$0xff]
    %v1059 = vld [vmem:[#allocation11 + $0x168] sm:$0xff]
    %v1060 = vld [vmem:[#allocation11 + $0x170] sm:$0xff]
    %v1061 = vld [vmem:[#allocation11 + $0x178] sm:$0xff]
    %v1062 = vld [vmem:[#allocation11 + $0x180] sm:$0xff]
    %v1063 = vld [vmem:[#allocation11 + $0x188] sm:$0xff]
    %v1064 = vld [vmem:[#allocation11 + $0x190] sm:$0xff]
    %v1065 = vld [vmem:[#allocation11 + $0x198] sm:$0xff]
    %v1066 = vld [vmem:[#allocation11 + $0x1a0] sm:$0xff]
    %v1067 = vld [vmem:[#allocation11 + $0x1a8] sm:$0xff]
    %v1068 = vld [vmem:[#allocation11 + $0x1b0] sm:$0xff]
    %v1069 = vld [vmem:[#allocation11 + $0x1b8] sm:$0xff]
    %v1070 = vld [vmem:[#allocation11 + $0x1c0] sm:$0xff]
    %v1071 = vld [vmem:[#allocation11 + $0x1c8] sm:$0xff]
    %v1072 = vld [vmem:[#allocation11 + $0x1d0] sm:$0xff]
    %v1073 = vld [vmem:[#allocation11 + $0x1d8] sm:$0xff]
    %v1074 = vld [vmem:[#allocation11 + $0x1e0] sm:$0xff]
    %v1075 = vld [vmem:[#allocation11 + $0x1e8] sm:$0xff]
    %v1076 = vld [vmem:[#allocation11 + $0x1f0] sm:$0xff]
    %v1077 = vld [vmem:[#allocation11 + $0x1f8] sm:$0xff]
    %v1078 = vld [vmem:[%s6] sm:$0x1]
    %v1080 = vperm.slane %v1078, 0
    %1082 = vmatpush.msra.mxu0 %v1029
    %1083 = vmatpush.msra.mxu0 %v1028
    %1084 = vmatpush.msra.mxu0 %v1027
    %1085 = vmatpush.msra.mxu0 %v1026
    %1086 = vmatpush.msra.mxu0 %v1025
    %1087 = vmatpush.msra.mxu0 %v1024
    %1088 = vmatpush.msra.mxu0 %v1023
    %1089 = vmatpush.msra.mxu0 %v1022
    %1090 = vmatpush.msra.mxu0 %v1021
    %1091 = vmatpush.msra.mxu0 %v1020
    %1092 = vmatpush.msra.mxu0 %v1019
    %1093 = vmatpush.msra.mxu0 %v1018
    %1094 = vmatpush.msra.mxu0 %v1017
    %1095 = vmatpush.msra.mxu0 %v1016
    %1096 = vmatpush.msra.mxu0 %v1015
    %1097 = vmatpush.msra.mxu0 %v1014
    %1098 = vmatmul.f32.gmra.mxu0 %v1010
    %v1099 = vpop.f32.mrf.mxu0
    %v1100 = vadd.f32 %v1080, %v1099
    %1101 = vdwg.mxu0
    %1102 = vmatpush.msra.mxu0 %v1045
    %1103 = vmatpush.msra.mxu0 %v1044
    %1104 = vmatpush.msra.mxu0 %v1043
    %1105 = vmatpush.msra.mxu0 %v1042
    %1106 = vmatpush.msra.mxu0 %v1041
    %1107 = vmatpush.msra.mxu0 %v1040
    %1108 = vmatpush.msra.mxu0 %v1039
    %1109 = vmatpush.msra.mxu0 %v1038
    %1110 = vmatpush.msra.mxu0 %v1037
    %1111 = vmatpush.msra.mxu0 %v1036
    %1112 = vmatpush.msra.mxu0 %v1035
    %1113 = vmatpush.msra.mxu0 %v1034
    %1114 = vmatpush.msra.mxu0 %v1033
    %1115 = vmatpush.msra.mxu0 %v1032
    %1116 = vmatpush.msra.mxu0 %v1031
    %1117 = vmatpush.msra.mxu0 %v1030
    %1118 = vmatmul.f32.gmra.mxu0 %v1011
    %v1119 = vpop.f32.mrf.mxu0
    %v1120 = vadd.f32 %v1100, %v1119
    %1121 = vdwg.mxu0
    %1122 = vmatpush.msra.mxu0 %v1061
    %1123 = vmatpush.msra.mxu0 %v1060
    %1124 = vmatpush.msra.mxu0 %v1059
    %1125 = vmatpush.msra.mxu0 %v1058
    %1126 = vmatpush.msra.mxu0 %v1057
    %1127 = vmatpush.msra.mxu0 %v1056
    %1128 = vmatpush.msra.mxu0 %v1055
    %1129 = vmatpush.msra.mxu0 %v1054
    %1130 = vmatpush.msra.mxu0 %v1053
    %1131 = vmatpush.msra.mxu0 %v1052
    %1132 = vmatpush.msra.mxu0 %v1051
    %1133 = vmatpush.msra.mxu0 %v1050
    %1134 = vmatpush.msra.mxu0 %v1049
    %1135 = vmatpush.msra.mxu0 %v1048
    %1136 = vmatpush.msra.mxu0 %v1047
    %1137 = vmatpush.msra.mxu0 %v1046
    %1138 = vmatmul.f32.gmra.mxu0 %v1012
    %v1139 = vpop.f32.mrf.mxu0
    %v1140 = vadd.f32 %v1120, %v1139
    %1141 = vdwg.mxu0
    %1142 = vmatpush.msra.mxu0 %v1077
    %1143 = vmatpush.msra.mxu0 %v1076
    %1144 = vmatpush.msra.mxu0 %v1075
    %1145 = vmatpush.msra.mxu0 %v1074
    %1146 = vmatpush.msra.mxu0 %v1073
    %1147 = vmatpush.msra.mxu0 %v1072
    %1148 = vmatpush.msra.mxu0 %v1071
    %1149 = vmatpush.msra.mxu0 %v1070
    %1150 = vmatpush.msra.mxu0 %v1069
    %1151 = vmatpush.msra.mxu0 %v1068
    %1152 = vmatpush.msra.mxu0 %v1067
    %1153 = vmatpush.msra.mxu0 %v1066
    %1154 = vmatpush.msra.mxu0 %v1065
    %1155 = vmatpush.msra.mxu0 %v1064
    %1156 = vmatpush.msra.mxu0 %v1063
    %1157 = vmatpush.msra.mxu0 %v1062
    %1158 = vmatmul.f32.gmra.mxu0 %v1013
    %v1159 = vpop.f32.mrf.mxu0
    %v1160 = vadd.f32 %v1140, %v1159
    %1161 = vdwg.mxu0
    %1162 = vst [vmem:[#allocation13] sm:$0x3] %v1160
    // Predicated region
    $region54: #{tpu_custom_call.1} parent=1 // pred_check
      _
    $region55: #{tpu_custom_call.1} parent=1 // pred_check_branch
      %1164 = sbr.rel (0) target = $region57
    $region56: #{tpu_custom_call.1} parent=1 // pred_region
      %1166 = vsyncadd [#allocation4], 0
      %s1168 = sshll.u32 [#allocation13], 4
      %s1169 = int_to_ptr.vmem [resolvable:$true] %s1168
      %s1170 = sshll.u32 %s7, 4
      %s1171 = int_to_ptr.hbm [resolvable:$true] %s1170
      %1173 = dma.vmem_to_hbm [thread:$0]  %s1169, 32, %s1171, [#allocation4]
    $region57: #{tpu_custom_call.1} parent=1 // pred_fallthru
      _
    // Predicated region
    $region58: #{tpu_custom_call.1} parent=1 // pred_check
      _
    $region59: #{tpu_custom_call.1} parent=1 // pred_check_branch
      %1175 = sbr.rel (0) target = $region61
    $region60: #{tpu_custom_call.1} parent=1 // pred_region
      %1177 = dma.done [#allocation4], 32
    $region61: #{tpu_custom_call.1} parent=1 // pred_fallthru
      _
    %1178 = vsyncpa [#allocation3], 1
    %1179 = vsyncpa [#allocation6], 1
    %1180 = vsyncpa [#allocation9], 1
    %1181 = vsyncpa [#allocation12], 1
    %1182 = vsyncpa [#allocation4], 1

</llo_original>
